<compile_context>
chip_gen: v6e
topology: v6e:2x2x1
jax: 0.10.0
libtpu: 0.0.40
codegen_flags: <defaults>
</compile_context>

<pallas_src>
import functools

import numpy as np
import jax
import jax.numpy as jnp
from jax import lax
from jax.experimental import pallas as pl
from jax.experimental.pallas import tpu as pltpu


def _round_up(x, m):
    return (x + m - 1) // m * m


def _conv_matmul_kernel(x_ref, w_ref, o_ref):
    # x_ref : (Mpad, Dpad)  kh-im2col rows (batch*output rows), +1s bias column,
    #                       zero-padded to a 128-lane multiple.
    # w_ref : (Dpad, Npad)  banded (block-Toeplitz) weights + bias row,
    #                       lane/contraction padded.
    # o_ref : (Mpad, Npad)  lane-dense output (w-major, c-minor lanes).
    # Single dense MXU matmul; bias is already inside the contraction.
    o_ref[...] = jnp.dot(
        x_ref[...], w_ref[...], preferred_element_type=jnp.float32
    ).astype(o_ref.dtype)


def conv_layer_pallas(x_nchw, weight_oihw, bias, *, stride, compute_dtype=None):
    """Reflection-padded conv2d matching the PyTorch ConvLayer.forward.

    x_nchw     : (N, Cin, H, W)
    weight_oihw: (Cout, Cin, K, K)   (PyTorch Conv2d weight layout)
    bias       : (Cout,)
    returns    : (N, Cout, Hout, Wout)
    """
    N, Cin, H, W = x_nchw.shape
    Cout, _, K, _ = weight_oihw.shape
    pad = K // 2  # int(np.floor(kernel_size / 2))

    # --- glue: NCHW -> NHWC, reflection pad (fuses under jit) -----------------
    x_nhwc = jnp.transpose(x_nchw, (0, 2, 3, 1))
    x_pad = jnp.pad(
        x_nhwc, ((0, 0), (pad, pad), (pad, pad), (0, 0)), mode="reflect")
    Hp, Wp = H + 2 * pad, W + 2 * pad
    Hout = (Hp - K) // stride + 1
    Wout = (Wp - K) // stride + 1

    # --- kh-im2col over output rows (stride handled HERE, not in-kernel) ------
    # rows for output row h: h*stride + kh, kh in [0, K)
    row_idx = (stride * np.arange(Hout)[:, None] +
               np.arange(K)[None, :]).reshape(-1)                 # (Hout*K,)
    x_rows = jnp.take(x_pad, row_idx, axis=1)                     # (N,Hout*K,Wp,Cin)
    D = K * Wp * Cin
    M = N * Hout
    x_im2col = x_rows.reshape(M, D)                               # rows: (n,h); cols: (kh,wp,ci)

    # Bias column (constant 1) + zero-pad contraction to a 128-lane multiple.
    Dpad = _round_up(D + 1, 128)
    Mpad = _round_up(M, 8)
    ones = jnp.ones((M, 1), x_im2col.dtype)
    x_mat = jnp.concatenate([x_im2col, ones], axis=1)             # (M, D+1)
    x_mat = jnp.pad(x_mat, ((0, Mpad - M), (0, Dpad - (D + 1))))  # (Mpad, Dpad)

    # --- banded (block-Toeplitz) weight: column stride baked in ---------------
    #   w_mat[(kh*Wp + wp)*Cin + ci, w*Cout + co] = W[co, ci, kh, wp - stride*w]
    w_hwio = jnp.transpose(weight_oihw, (2, 3, 1, 0)).astype(jnp.float32)  # (K,K,Cin,Cout)
    tap = (np.arange(Wp)[:, None, None] ==
           (stride * np.arange(Wout)[None, :, None] +
            np.arange(K)[None, None, :])).astype(np.float32)      # (Wp,Wout,K)
    w_band = jnp.einsum("pwq,hqio->hpiwo", tap, w_hwio)           # (K,Wp,Cin,Wout,Cout)
    Ncols = Wout * Cout
    Npad = _round_up(Ncols, 128)
    w_mat = w_band.reshape(D, Ncols)
    b_row = jnp.tile(bias.astype(jnp.float32), Wout).reshape(1, Ncols)
    w_mat = jnp.concatenate([w_mat, b_row], axis=0)               # (D+1, Ncols)
    w_mat = jnp.pad(w_mat, ((0, Dpad - (D + 1)), (0, Npad - Ncols)))

    # Optional reduced-precision MXU operands (bf16 halves DMA bytes and cuts
    # MXU passes ~3x on all generations; default keeps the module's f32 math).
    cdt = compute_dtype if compute_dtype is not None else x_nchw.dtype
    x_mat = x_mat.astype(cdt)
    w_mat = w_mat.astype(cdt)

    out_mat = pl.pallas_call(
        _conv_matmul_kernel,
        out_shape=jax.ShapeDtypeStruct((Mpad, Npad), x_nchw.dtype),
        grid_spec=pltpu.PrefetchScalarGridSpec(
            num_scalar_prefetch=0,
            grid=(1,),  # single step: whole problem fits trivially in VMEM
            in_specs=[
                pl.BlockSpec((Mpad, Dpad), lambda i: (0, 0)),
                pl.BlockSpec((Dpad, Npad), lambda i: (0, 0)),
            ],
            out_specs=pl.BlockSpec((Mpad, Npad), lambda i: (0, 0)),
        ),
        compiler_params=pltpu.CompilerParams(
            dimension_semantics=("arbitrary",)),
    )(x_mat, w_mat)

    # (Mpad, Npad) -> (N, Hout, Wout, Cout) -> NCHW (glue).
    out = out_mat[:M, :Ncols].reshape(N, Hout, Wout, Cout)
    return jnp.transpose(out, (0, 3, 1, 2))


def _reference_conv(x_nchw, weight_oihw, bias, *, stride):
    """Pure-JAX reference (reflection pad + conv) for correctness check."""
    K = weight_oihw.shape[-1]
    pad = K // 2
    x_pad = jnp.pad(
        x_nchw, ((0, 0), (0, 0), (pad, pad), (pad, pad)), mode="reflect")
    out = lax.conv_general_dilated(
        x_pad,
        weight_oihw,
        window_strides=(stride, stride),
        padding="VALID",
        dimension_numbers=("NCHW", "OIHW", "NCHW"),
    )
    return out + bias[None, :, None, None]


if __name__ == "__main__":
    # Module config: ConvLayer(in_channels=4, out_channels=8, kernel_size=3, stride=1)
    in_channels, out_channels, kernel_size, stride = 4, 8, 3, 1
    N, H, W = 2, 16, 16

    key = jax.random.PRNGKey(0)
    kx, kw, kb = jax.random.split(key, 3)

    x = jax.random.normal(kx, (N, in_channels, H, W), dtype=jnp.float32)
    # Deterministic synthetic parameters (shapes follow torch.nn.Conv2d).
    fan_in = in_channels * kernel_size * kernel_size
    bound = 1.0 / np.sqrt(fan_in)
    weight = jax.random.uniform(
        kw, (out_channels, in_channels, kernel_size, kernel_size),
        minval=-bound, maxval=bound, dtype=jnp.float32)
    bias = jax.random.uniform(
        kb, (out_channels,), minval=-bound, maxval=bound, dtype=jnp.float32)

    conv_fn = jax.jit(functools.partial(conv_layer_pallas, stride=stride))
    out = conv_fn(x, weight, bias)
    out = jax.block_until_ready(out)

    ref = _reference_conv(x, weight, bias, stride=stride)
    assert out.shape == ref.shape == (N, out_channels, H, W)
    assert jnp.allclose(out, ref, atol=1e-4, rtol=1e-4)

    print("KERNEL_OK")
</pallas_src>

<mosaic_0001>
module attributes {stable_mosaic.version = 11 : i64} {
  func.func @_conv_matmul_kernel(%arg0: i32, %arg1: memref<32x256xf32, #tpu.memory_space<vmem>>, %arg2: memref<256x128xf32, #tpu.memory_space<vmem>>, %arg3: memref<32x128xf32, #tpu.memory_space<vmem>>) attributes {dimension_semantics = [#tpu.dimension_semantics<arbitrary>], iteration_bounds = array<i64: 1>, scalar_prefetch = 0 : i64, scratch_operands = 0 : i64, tpu.core_type = #tpu.core_type<tc>, window_params = [{pipeline_mode = #tpu.pipeline_mode<synchronous>, transform_indices = @transform_0, window_bounds = array<i64: 32, 256>}, {pipeline_mode = #tpu.pipeline_mode<synchronous>, transform_indices = @transform_1, window_bounds = array<i64: 256, 128>}, {pipeline_mode = #tpu.pipeline_mode<synchronous>, transform_indices = @transform_2, window_bounds = array<i64: 32, 128>}]} {
    %c0 = arith.constant 0 : index
    %c0_0 = arith.constant 0 : index
    %0 = vector.load %arg1[%c0, %c0_0] : memref<32x256xf32, #tpu.memory_space<vmem>>, vector<32x256xf32>
    %c0_1 = arith.constant 0 : index
    %c0_2 = arith.constant 0 : index
    %1 = vector.load %arg2[%c0_1, %c0_2] : memref<256x128xf32, #tpu.memory_space<vmem>>, vector<256x128xf32>
    %cst = arith.constant dense<0.000000e+00> : vector<32x128xf32>
    %2 = tpu.matmul %0, %1, %cst {dimension_numbers = #tpu.dot_dimension_numbers<[1], [0], [0], [1], [0, 0, 1, 1], [], []>} : vector<32x256xf32>, vector<256x128xf32>, vector<32x128xf32> -> vector<32x128xf32>
    %c0_3 = arith.constant 0 : index
    %c0_4 = arith.constant 0 : index
    %3 = vector.load %arg3[%c0_3, %c0_4] : memref<32x128xf32, #tpu.memory_space<vmem>>, vector<32x128xf32>
    tpu.vector_store %arg3[%c0_3, %c0_4], %2 {strides = array<i32>} : memref<32x128xf32, #tpu.memory_space<vmem>>, vector<32x128xf32>,
    return
  }
  func.func @transform_0(%arg0: i32) -> (i32, i32) {
    %c0_i32 = arith.constant 0 : i32
    %c0_i32_0 = arith.constant 0 : i32
    %c0_i32_1 = arith.constant 0 : i32
    return %c0_i32, %c0_i32_0 : i32, i32
  }
  func.func @transform_1(%arg0: i32) -> (i32, i32) {
    %c0_i32 = arith.constant 0 : i32
    %c0_i32_0 = arith.constant 0 : i32
    %c0_i32_1 = arith.constant 0 : i32
    return %c0_i32, %c0_i32_0 : i32, i32
  }
  func.func @transform_2(%arg0: i32) -> (i32, i32) {
    %c0_i32 = arith.constant 0 : i32
    %c0_i32_0 = arith.constant 0 : i32
    %c0_i32_1 = arith.constant 0 : i32
    return %c0_i32, %c0_i32_0 : i32, i32
  }
}

</mosaic_0001>

<llo_original>
// kernel: tile.8
$region0: #{tile.8}
  #allocation0 [shape = 's32[1]{0}', space=sflag, size = 0x4, scoped, tag = 'scoped memory for tile.8']
  %s0 = inlined_call_operand.vmem [shape: f32[8], index: 0, kind: input, shape index: {}]
  %s1 = inlined_call_operand.vmem [shape: f32[16,8], index: 1, kind: output, shape index: {}]
  // Predicated region
  $region2: #{tile.8} parent=0 // pred_check
    _
  $region3: #{tile.8} parent=0 // pred_check_branch
    %3 = sbr.rel (0) target = $region5
  $region4: #{tile.8} parent=0 // pred_region
    _
  $region5: #{tile.8} parent=0 // pred_fallthru
    _
  %v4 = vld [vmem:[%s0] ss:$0 sm:$0xff]
  %5 = vst [vmem:[%s1] sm:$0xff] %v4
  %s6 = scalar_lea.vmem %s1, 8
  %7 = vst [vmem:[%s6] sm:$0xff] %v4

// kernel: tile.9
$region0: #{tile.9}
  %s0 = inlined_call_operand.vmem [shape: f32[16,8], index: 0, kind: input, shape index: {}]
  %s1 = inlined_call_operand.vmem [shape: f32[1,128], index: 1, kind: output, shape index: {}]
  $region1: #{tile.9} parent=0
    #allocation0 [shape = 'u8[4096]{0}', space=vmem, size = 0x1000, scoped, tag = 'scoped mem for output reshape']
    %v2 = vld [vmem:[%s0] sm:$0x1]
    %vm3 = vcmask 64512
    %4 = vst.msk [vmem:[#allocation0] sm:$0x1] %vm3, %v2
    %s5 = scalar_lea.vmem %s0, 15
    %v6 = vld [vmem:[%s5] sm:$0x1]
    %7 = vrot.lane.b32.xlu0 %v6, 120
    %v8 = vpop.permute.xlu0 %7
    %vm9 = vcmask 1048512
    %10 = vst.msk [vmem:[#allocation0] sm:$0x1] %vm9, %v8
    %s11 = scalar_lea.vmem %s0, 14
    %v12 = vld [vmem:[%s11] sm:$0x1]
    %13 = vrot.lane.b32.xlu0 %v12, 112
    %v14 = vpop.permute.xlu0 %13
    %vm15 = vcmask 982912
    %16 = vst.msk [vmem:[#allocation0] sm:$0x1] %vm15, %v14
    %s17 = scalar_lea.vmem %s0, 13
    %v18 = vld [vmem:[%s17] sm:$0x1]
    %19 = vrot.lane.b32.xlu0 %v18, 104
    %v20 = vpop.permute.xlu0 %19
    %vm21 = vcmask 917312
    %22 = vst.msk [vmem:[#allocation0] sm:$0x1] %vm21, %v20
    %s23 = scalar_lea.vmem %s0, 12
    %v24 = vld [vmem:[%s23] sm:$0x1]
    %25 = vrot.lane.b32.xlu0 %v24, 96
    %v26 = vpop.permute.xlu0 %25
    %vm27 = vcmask 851712
    %28 = vst.msk [vmem:[#allocation0] sm:$0x1] %vm27, %v26
    %s29 = scalar_lea.vmem %s0, 11
    %v30 = vld [vmem:[%s29] sm:$0x1]
    %31 = vrot.lane.b32.xlu0 %v30, 88
    %v32 = vpop.permute.xlu0 %31
    %vm33 = vcmask 786112
    %34 = vst.msk [vmem:[#allocation0] sm:$0x1] %vm33, %v32
    %s35 = scalar_lea.vmem %s0, 10
    %v36 = vld [vmem:[%s35] sm:$0x1]
    %37 = vrot.lane.b32.xlu0 %v36, 80
    %v38 = vpop.permute.xlu0 %37
    %vm39 = vcmask 720512
    %40 = vst.msk [vmem:[#allocation0] sm:$0x1] %vm39, %v38
    %s41 = scalar_lea.vmem %s0, 9
    %v42 = vld [vmem:[%s41] sm:$0x1]
    %43 = vrot.lane.b32.xlu0 %v42, 72
    %v44 = vpop.permute.xlu0 %43
    %vm45 = vcmask 654912
    %46 = vst.msk [vmem:[#allocation0] sm:$0x1] %vm45, %v44
    %s47 = scalar_lea.vmem %s0, 8
    %v48 = vld [vmem:[%s47] sm:$0x1]
    %49 = vrot.lane.b32.xlu0 %v48, 64
    %v50 = vpop.permute.xlu0 %49
    %vm51 = vcmask 589312
    %52 = vst.msk [vmem:[#allocation0] sm:$0x1] %vm51, %v50
    %s53 = scalar_lea.vmem %s0, 7
    %v54 = vld [vmem:[%s53] sm:$0x1]
    %55 = vrot.lane.b32.xlu0 %v54, 56
    %v56 = vpop.permute.xlu0 %55
    %vm57 = vcmask 523712
    %58 = vst.msk [vmem:[#allocation0] sm:$0x1] %vm57, %v56
    %s59 = scalar_lea.vmem %s0, 6
    %v60 = vld [vmem:[%s59] sm:$0x1]
    %61 = vrot.lane.b32.xlu0 %v60, 48
    %v62 = vpop.permute.xlu0 %61
    %vm63 = vcmask 458112
    %64 = vst.msk [vmem:[#allocation0] sm:$0x1] %vm63, %v62
    %s65 = scalar_lea.vmem %s0, 5
    %v66 = vld [vmem:[%s65] sm:$0x1]
    %67 = vrot.lane.b32.xlu0 %v66, 40
    %v68 = vpop.permute.xlu0 %67
    %vm69 = vcmask 392512
    %70 = vst.msk [vmem:[#allocation0] sm:$0x1] %vm69, %v68
    %s71 = scalar_lea.vmem %s0, 4
    %v72 = vld [vmem:[%s71] sm:$0x1]
    %73 = vrot.lane.b32.xlu0 %v72, 32
    %v74 = vpop.permute.xlu0 %73
    %vm75 = vcmask 326912
    %76 = vst.msk [vmem:[#allocation0] sm:$0x1] %vm75, %v74
    %s77 = scalar_lea.vmem %s0, 3
    %v78 = vld [vmem:[%s77] sm:$0x1]
    %79 = vrot.lane.b32.xlu0 %v78, 24
    %v80 = vpop.permute.xlu0 %79
    %vm81 = vcmask 261312
    %82 = vst.msk [vmem:[#allocation0] sm:$0x1] %vm81, %v80
    %s83 = scalar_lea.vmem %s0, 2
    %v84 = vld [vmem:[%s83] sm:$0x1]
    %85 = vrot.lane.b32.xlu0 %v84, 16
    %v86 = vpop.permute.xlu0 %85
    %vm87 = vcmask 195712
    %88 = vst.msk [vmem:[#allocation0] sm:$0x1] %vm87, %v86
    %s89 = scalar_lea.vmem %s0, 1
    %v90 = vld [vmem:[%s89] sm:$0x1]
    %91 = vrot.lane.b32.xlu0 %v90, 8
    %v92 = vpop.permute.xlu0 %91
    %vm93 = vcmask 130112
    %94 = vst.msk [vmem:[#allocation0] sm:$0x1] %vm93, %v92
    %s96 = sshll.u32 1, 1
    %s97 = ssub.s32 %s96, 1
    %v99 = vld [vmem:[#allocation0] sm:%s97]
    %s100 = sshll.u32 1, 1
    %s101 = ssub.s32 %s100, 1
    %102 = vst [vmem:[%s1] sm:%s101] %v99

// kernel: conv_layer_pallas.1
$region0: #{conv_layer_pallas.1}
  #allocation0 [shape = 'u32[]', space=smem, size = 0x4, offset = 0x4, fixed_abs, tag = 'smem constant byte address 0x4 - core index']
  #allocation1 [shape = 'u32[144,128]{1,0:T(1,128)}', space=vmem, size = 0x12000, scoped, tag = 'internal scratch']
  %s0 = inlined_call_operand.vmem [shape: f32[32,256], index: 0, kind: input, shape index: {}]
  %s1 = inlined_call_operand.vmem [shape: f32[256,128], index: 1, kind: input, shape index: {}]
  %s2 = inlined_call_operand.vmem [shape: f32[32,128], index: 2, kind: output, shape index: {}]
  %s3 = sld [smem:[#allocation0]]
  $region18: #{conv_layer_pallas.1} parent=0
    _
  %s5 = ssub.s32 1, %s3
  %s6 = scalar_select 0, %s5, %s3
  // Predicated region
  $region2: #{conv_layer_pallas.1} parent=0 // pred_check
    _
  $region3: #{conv_layer_pallas.1} parent=0 // pred_check_branch
    %8 = sbr.rel (0) target = $region5
  $region4: #{conv_layer_pallas.1} parent=0 // pred_region
    _
  $region5: #{conv_layer_pallas.1} parent=0 // pred_fallthru
    _
  // Predicated region
  $region6: #{conv_layer_pallas.1} parent=0 // pred_check
    _
  $region7: #{conv_layer_pallas.1} parent=0 // pred_check_branch
    %10 = sbr.rel (0) target = $region9
  $region8: #{conv_layer_pallas.1} parent=0 // pred_region
    _
  $region9: #{conv_layer_pallas.1} parent=0 // pred_fallthru
    _
  %v11 = vld [vmem:[%s0] sm:$0xff]
  %v12 = vld [vmem:[%s0 + $0x8] sm:$0xff]
  %v13 = vld [vmem:[%s0 + $0x10] sm:$0xff]
  %v14 = vld [vmem:[%s0 + $0x18] sm:$0xff]
  %v15 = vld [vmem:[%s0 + $0x20] sm:$0xff]
  %v16 = vld [vmem:[%s0 + $0x28] sm:$0xff]
  %v17 = vld [vmem:[%s0 + $0x30] sm:$0xff]
  %v18 = vld [vmem:[%s0 + $0x38] sm:$0xff]
  %v19 = vld [vmem:[%s1] sm:$0xff]
  %v20 = vld [vmem:[%s1 + $0x8] sm:$0xff]
  %v21 = vld [vmem:[%s1 + $0x10] sm:$0xff]
  %v22 = vld [vmem:[%s1 + $0x18] sm:$0xff]
  %v23 = vld [vmem:[%s1 + $0x20] sm:$0xff]
  %v24 = vld [vmem:[%s1 + $0x28] sm:$0xff]
  %v25 = vld [vmem:[%s1 + $0x30] sm:$0xff]
  %v26 = vld [vmem:[%s1 + $0x38] sm:$0xff]
  %v27 = vld [vmem:[%s1 + $0x40] sm:$0xff]
  %v28 = vld [vmem:[%s1 + $0x48] sm:$0xff]
  %v29 = vld [vmem:[%s1 + $0x50] sm:$0xff]
  %v30 = vld [vmem:[%s1 + $0x58] sm:$0xff]
  %v31 = vld [vmem:[%s1 + $0x60] sm:$0xff]
  %v32 = vld [vmem:[%s1 + $0x68] sm:$0xff]
  %v33 = vld [vmem:[%s1 + $0x70] sm:$0xff]
  %v34 = vld [vmem:[%s1 + $0x78] sm:$0xff]
  %v35 = vld [vmem:[%s1 + $0x80] sm:$0xff]
  %v36 = vld [vmem:[%s1 + $0x88] sm:$0xff]
  %v37 = vld [vmem:[%s1 + $0x90] sm:$0xff]
  %v38 = vld [vmem:[%s1 + $0x98] sm:$0xff]
  %v39 = vld [vmem:[%s1 + $0xa0] sm:$0xff]
  %v40 = vld [vmem:[%s1 + $0xa8] sm:$0xff]
  %v41 = vld [vmem:[%s1 + $0xb0] sm:$0xff]
  %v42 = vld [vmem:[%s1 + $0xb8] sm:$0xff]
  %v43 = vld [vmem:[%s1 + $0xc0] sm:$0xff]
  %v44 = vld [vmem:[%s1 + $0xc8] sm:$0xff]
  %v45 = vld [vmem:[%s1 + $0xd0] sm:$0xff]
  %v46 = vld [vmem:[%s1 + $0xd8] sm:$0xff]
  %v47 = vld [vmem:[%s1 + $0xe0] sm:$0xff]
  %v48 = vld [vmem:[%s1 + $0xe8] sm:$0xff]
  %v49 = vld [vmem:[%s1 + $0xf0] sm:$0xff]
  %v50 = vld [vmem:[%s1 + $0xf8] sm:$0xff]
  %51 = vmatprep.subr.mxu0 0.0
  %52 = vmatpush1.msra.mxu0 %v34
  %53 = vmatprep.subr.mxu0 0.0
  %54 = vmatpush1.msra.mxu0 %v33
  %55 = vmatprep.subr.mxu0 0.0
  %56 = vmatpush1.msra.mxu0 %v32
  %57 = vmatprep.subr.mxu0 0.0
  %58 = vmatpush1.msra.mxu0 %v31
  %59 = vmatprep.subr.mxu0 0.0
  %60 = vmatpush1.msra.mxu0 %v30
  %61 = vmatprep.subr.mxu0 0.0
  %62 = vmatpush1.msra.mxu0 %v29
  %63 = vmatprep.subr.mxu0 0.0
  %64 = vmatpush1.msra.mxu0 %v28
  %65 = vmatprep.subr.mxu0 0.0
  %66 = vmatpush1.msra.mxu0 %v27
  %67 = vmatprep.subr.mxu0 0.0
  %68 = vmatpush1.msra.mxu0 %v26
  %69 = vmatprep.subr.mxu0 0.0
  %70 = vmatpush1.msra.mxu0 %v25
  %71 = vmatprep.subr.mxu0 0.0
  %72 = vmatpush1.msra.mxu0 %v24
  %73 = vmatprep.subr.mxu0 0.0
  %74 = vmatpush1.msra.mxu0 %v23
  %75 = vmatprep.subr.mxu0 0.0
  %76 = vmatpush1.msra.mxu0 %v22
  %77 = vmatprep.subr.mxu0 0.0
  %78 = vmatpush1.msra.mxu0 %v21
  %79 = vmatprep.subr.mxu0 0.0
  %80 = vmatpush1.msra.mxu0 %v20
  %81 = vmatprep.subr.mxu0 0.0
  %82 = vmatpush1.msra.mxu0 %v19
  %83 = vmatprep.subr.mxu0 0.0
  %84 = vmatpush2.msra.mxu0 %v50
  %85 = vmatprep.subr.mxu0 0.0
  %86 = vmatpush2.msra.mxu0 %v49
  %87 = vmatprep.subr.mxu0 0.0
  %88 = vmatpush2.msra.mxu0 %v48
  %89 = vmatprep.subr.mxu0 0.0
  %90 = vmatpush2.msra.mxu0 %v47
  %91 = vmatprep.subr.mxu0 0.0
  %92 = vmatpush2.msra.mxu0 %v46
  %93 = vmatprep.subr.mxu0 0.0
  %94 = vmatpush2.msra.mxu0 %v45
  %95 = vmatprep.subr.mxu0 0.0
  %96 = vmatpush2.msra.mxu0 %v44
  %97 = vmatprep.subr.mxu0 0.0
  %98 = vmatpush2.msra.mxu0 %v43
  %99 = vmatprep.subr.mxu0 0.0
  %100 = vmatpush2.msra.mxu0 %v42
  %101 = vmatprep.subr.mxu0 0.0
  %102 = vmatpush2.msra.mxu0 %v41
  %103 = vmatprep.subr.mxu0 0.0
  %104 = vmatpush2.msra.mxu0 %v40
  %105 = vmatprep.subr.mxu0 0.0
  %106 = vmatpush2.msra.mxu0 %v39
  %107 = vmatprep.subr.mxu0 0.0
  %108 = vmatpush2.msra.mxu0 %v38
  %109 = vmatprep.subr.mxu0 0.0
  %110 = vmatpush2.msra.mxu0 %v37
  %111 = vmatprep.subr.mxu0 0.0
  %112 = vmatpush2.msra.mxu0 %v36
  %113 = vmatprep.subr.mxu0 0.0
  %114 = vmatpush2.msra.mxu0 %v35
  %115 = vmatprep.mubr.f32.mxu0 %v12
  %116 = vmatmul.mubr.f32.gmra.mxu0 %v11
  %v117 = vpop.f32.mrf.mxu0
  %v118 = vadd.f32 0.0, %v117
  %v119 = vpop.f32.mrf.mxu0
  %120 = vmatprep.mubr.f32.mxu0 %v14
  %121 = vmatmul.mubr.f32.gmra.mxu0 %v13
  %v122 = vpop.f32.mrf.mxu0
  %v123 = vadd.f32 0.0, %v122
  %v124 = vpop.f32.mrf.mxu0
  %125 = vmatprep.mubr.f32.mxu0 %v16
  %126 = vmatmul.mubr.f32.gmra.mxu0 %v15
  %v127 = vpop.f32.mrf.mxu0
  %v128 = vadd.f32 0.0, %v127
  %v129 = vpop.f32.mrf.mxu0
  %130 = vmatprep.mubr.f32.mxu0 %v18
  %131 = vmatmul.mubr.f32.gmra.mxu0 %v17
  %v132 = vpop.f32.mrf.mxu0
  %v133 = vadd.f32 0.0, %v132
  %v134 = vpop.f32.mrf.mxu0
  %135 = vdwg.mxu0
  %136 = vst [vmem:[%s2] sm:$0xff] %v118
  %137 = vst [vmem:[%s2 + $0x8] sm:$0xff] %v123
  %138 = vst [vmem:[%s2 + $0x10] sm:$0xff] %v128
  %139 = vst [vmem:[%s2 + $0x18] sm:$0xff] %v133
  // Predicated region
  $region10: #{conv_layer_pallas.1} parent=0 // pred_check
    _
  $region11: #{conv_layer_pallas.1} parent=0 // pred_check_branch
    %141 = sbr.rel (0) target = $region13
  $region12: #{conv_layer_pallas.1} parent=0 // pred_region
    _
  $region13: #{conv_layer_pallas.1} parent=0 // pred_fallthru
    _
  // Predicated region
  $region14: #{conv_layer_pallas.1} parent=0 // pred_check
    _
  $region15: #{conv_layer_pallas.1} parent=0 // pred_check_branch
    %143 = sbr.rel (0) target = $region17
  $region16: #{conv_layer_pallas.1} parent=0 // pred_region
    _
  $region17: #{conv_layer_pallas.1} parent=0 // pred_fallthru
    _

</llo_original>
